<compile_context>
chip_gen: v7x
topology: tpu7x:2x2x1
jax: 0.10.0
libtpu: 0.0.40
codegen_flags: <defaults>
</compile_context>

<pallas_src>
import functools

import jax
import jax.numpy as jnp
from jax import lax
from jax.experimental import pallas as pl
from jax.experimental.pallas import tpu as pltpu


# --------------------------------------------------------------------------- #
# Pallas kernel: full GaussianNetwork forward (2-layer MLP + fused heads + sample)
# --------------------------------------------------------------------------- #
def _goal_encoder_kernel(
    x_ref,      # [tb, S]    bf16 input state features
    eps_ref,    # [tb, G]    f32  Normal(0,1) noise for the reparameterized sample
    w1_ref,     # [S, H]     bf16
    b1_ref,     # [1, H]     f32
    w2_ref,     # [H, H]     bf16
    b2_ref,     # [1, H]     f32
    wh_ref,     # [H, 2G]    bf16  fused head weight  (mean | log_std)
    bh_ref,     # [1, 2G]    f32   fused head bias
    out_ref,    # [tb, 3G]   f32   lane-dense slab: z | mean | std
    *,
    goal_dim,
):
    G = goal_dim

    # bf16 operands into the MXU, f32 accumulation; elementwise path stays f32
    # (v5e's VPU/EUP have no bf16 support).
    h1 = jnp.dot(x_ref[...], w1_ref[...],
                 preferred_element_type=jnp.float32) + b1_ref[...]
    h1 = jnp.maximum(h1, 0.0)                                   # ReLU (f32)

    h2 = jnp.dot(h1.astype(jnp.bfloat16), w2_ref[...],
                 preferred_element_type=jnp.float32) + b2_ref[...]
    h2 = jnp.maximum(h2, 0.0)                                   # ReLU (f32)

    # Fused heads: one matmul producing [tb, 2G] = mean | log_std.
    head = jnp.dot(h2.astype(jnp.bfloat16), wh_ref[...],
                   preferred_element_type=jnp.float32) + bh_ref[...]

    # Apply exp only to the log_std lane group via a lane-index predicate on the
    # contiguous 2G-lane result (no separate unaligned slices on the exp path).
    col = lax.broadcasted_iota(jnp.int32, head.shape, 1)
    mean_std = jnp.where(col < G, head, jnp.exp(head))          # [tb, 2G] = mean|std

    mean = mean_std[:, :G]
    std = mean_std[:, G:]
    z = mean + std * eps_ref[...]                               # rsample()

    # Assemble the [tb, 3G] slab in-register and emit ONE full-width store.
    out_ref[...] = jnp.concatenate([z, mean_std], axis=1)


def _pick_batch_tile(batch):
    """Pick the batch tile size.

    Large tiles (up to 2048 rows) amortize the ~0.35 us per-grid-step overhead.
    When the batch is big enough, cap the tile so the grid has >= 2 blocks and
    the ("parallel",) batch axis can be sharded across v7x's two TensorCores
    (a no-op on v5e/v6e, which have a single TensorCore).
    """
    candidates = (2048, 1024, 512, 256, 128, 64, 32, 16, 8)
    if batch >= 16:
        for tb in candidates:
            if 2 * tb <= batch and batch % tb == 0:
                return tb
    for tb in candidates:
        if batch % tb == 0:
            return tb
    return batch   # tiny batches (e.g. the B=2 demo): one full-batch block


def visual_goal_encoder_forward(x, eps, params):
    """Runs the VisualGoalEncoder forward pass in a single Pallas kernel.

    Args:
      x:      [B, state_dim] float32 or bfloat16 (already-perceived observation).
      eps:    [B, goal_dim]  float32 Normal(0,1) noise for the rsample.
      params: dict of weights (see _init_params): w1/w2/wh in bf16, biases f32.

    Returns:
      (z, dist, mean, std) with dist == (mean, std).
    """
    B = x.shape[0]
    S, H = params["w1"].shape
    G2 = params["wh"].shape[1]
    G = G2 // 2

    # The MXU consumes bf16 operands anyway; feeding bf16 halves the input DMA.
    if x.dtype != jnp.bfloat16:
        x = x.astype(jnp.bfloat16)
    eps = eps.astype(jnp.float32)

    tb = _pick_batch_tile(B)
    nb = B // tb

    kernel = functools.partial(_goal_encoder_kernel, goal_dim=G)

    out = pl.pallas_call(
        kernel,
        out_shape=jax.ShapeDtypeStruct((B, 3 * G), jnp.float32),
        grid=(nb,),
        in_specs=[
            pl.BlockSpec((tb, S), lambda i: (i, 0)),     # x: batch-tiled
            pl.BlockSpec((tb, G), lambda i: (i, 0)),     # eps: batch-tiled
            pl.BlockSpec((S, H), lambda i: (0, 0)),      # weights stay resident
            pl.BlockSpec((1, H), lambda i: (0, 0)),      # across batch tiles
            pl.BlockSpec((H, H), lambda i: (0, 0)),
            pl.BlockSpec((1, H), lambda i: (0, 0)),
            pl.BlockSpec((H, G2), lambda i: (0, 0)),
            pl.BlockSpec((1, G2), lambda i: (0, 0)),
        ],
        out_specs=pl.BlockSpec((tb, 3 * G), lambda i: (i, 0)),
        compiler_params=pltpu.CompilerParams(
            dimension_semantics=("parallel",)),
    )(
        x, eps,
        params["w1"], params["b1"],
        params["w2"], params["b2"],
        params["wh"], params["bh"],
    )

    z = out[:, :G]
    mean = out[:, G:2 * G]
    std = out[:, 2 * G:3 * G]
    dist = (mean, std)  # stands in for torch.distributions.Normal(mean, std)
    return z, dist, mean, std


# --------------------------------------------------------------------------- #
# Deterministic parameter initialization (PyTorch nn.Linear-style uniform init)
# with fused heads and bf16 weight storage (deliberate precision trade-off).
# --------------------------------------------------------------------------- #
def _linear_init(key, fan_in, fan_out):
    kw, kb = jax.random.split(key)
    bound = 1.0 / jnp.sqrt(jnp.asarray(fan_in, jnp.float32))
    w = jax.random.uniform(kw, (fan_in, fan_out), jnp.float32, -bound, bound)
    b = jax.random.uniform(kb, (1, fan_out), jnp.float32, -bound, bound)
    return w, b


def _init_params(key, state_dim, hidden_dim, goal_dim):
    k1, k2, k3, k4 = jax.random.split(key, 4)
    w1, b1 = _linear_init(k1, state_dim, hidden_dim)
    w2, b2 = _linear_init(k2, hidden_dim, hidden_dim)
    wm, bm = _linear_init(k3, hidden_dim, goal_dim)
    ws, bs = _linear_init(k4, hidden_dim, goal_dim)

    # Fuse the two heads: one [H, 2G] matmul instead of two [H, G] matmuls.
    wh = jnp.concatenate([wm, ws], axis=1)
    bh = jnp.concatenate([bm, bs], axis=1)

    # Weights in bf16 (halve HBM->VMEM DMA); biases stay f32.
    return dict(
        w1=w1.astype(jnp.bfloat16), b1=b1,
        w2=w2.astype(jnp.bfloat16), b2=b2,
        wh=wh.astype(jnp.bfloat16), bh=bh,
    )


# --------------------------------------------------------------------------- #
# Pure-JAX reference (same bf16-operand / f32-accumulate math as the kernel)
# --------------------------------------------------------------------------- #
def _reference_mean_std(x, p):
    f32 = jnp.float32
    xb = x.astype(jnp.bfloat16)
    h1 = jnp.maximum(
        jnp.dot(xb, p["w1"], preferred_element_type=f32) + p["b1"], 0.0)
    h2 = jnp.maximum(
        jnp.dot(h1.astype(jnp.bfloat16), p["w2"], preferred_element_type=f32)
        + p["b2"], 0.0)
    head = (jnp.dot(h2.astype(jnp.bfloat16), p["wh"], preferred_element_type=f32)
            + p["bh"])
    G = p["wh"].shape[1] // 2
    return head[:, :G], jnp.exp(head[:, G:])


if __name__ == "__main__":
    # Small shapes consistent with the module: state_dim=64, goal_dim=32.
    batch, state_dim, hidden_dim, goal_dim = 2, 64, 128, 32

    root = jax.random.PRNGKey(0)
    k_params, k_x, k_eps = jax.random.split(root, 3)

    params = _init_params(k_params, state_dim, hidden_dim, goal_dim)
    x = jax.random.normal(k_x, (batch, state_dim), jnp.float32)
    eps = jax.random.normal(k_eps, (batch, goal_dim), jnp.float32)

    z, dist, mean, std = visual_goal_encoder_forward(x, eps, params)
    jax.block_until_ready((z, mean, std))

    # Check against a pure-JAX reference of the same bf16/f32 math.
    mean_ref, std_ref = _reference_mean_std(x, params)
    z_ref = mean_ref + std_ref * eps
    assert jnp.allclose(mean, mean_ref, atol=1e-2, rtol=1e-2), "mean mismatch"
    assert jnp.allclose(std, std_ref, atol=1e-2, rtol=1e-2), "std mismatch"
    assert jnp.allclose(z, z_ref, atol=1e-2, rtol=1e-2), "sample mismatch"
    assert bool(jnp.all(std > 0.0)), "std must be positive"
    assert bool(jnp.all(jnp.isfinite(z))), "non-finite sample"

    print("KERNEL_OK")
</pallas_src>

<mosaic_0001>
module attributes {stable_mosaic.version = 11 : i64} {
  func.func @_goal_encoder_kernel(%arg0: i32, %arg1: memref<2x64xbf16, #tpu.memory_space<vmem>>, %arg2: memref<2x32xf32, #tpu.memory_space<vmem>>, %arg3: memref<64x128xbf16, #tpu.memory_space<vmem>>, %arg4: memref<1x128xf32, #tpu.memory_space<vmem>>, %arg5: memref<128x128xbf16, #tpu.memory_space<vmem>>, %arg6: memref<1x128xf32, #tpu.memory_space<vmem>>, %arg7: memref<128x64xbf16, #tpu.memory_space<vmem>>, %arg8: memref<1x64xf32, #tpu.memory_space<vmem>>, %arg9: memref<2x96xf32, #tpu.memory_space<vmem>>) attributes {dimension_semantics = [#tpu.dimension_semantics<parallel>], iteration_bounds = array<i64: 1>, scalar_prefetch = 0 : i64, scratch_operands = 0 : i64, tpu.core_type = #tpu.core_type<tc>, window_params = [{transform_indices = @transform_0, window_bounds = array<i64: 2, 64>}, {transform_indices = @transform_1, window_bounds = array<i64: 2, 32>}, {pipeline_mode = #tpu.pipeline_mode<synchronous>, transform_indices = @transform_2, window_bounds = array<i64: 64, 128>}, {pipeline_mode = #tpu.pipeline_mode<synchronous>, transform_indices = @transform_3, window_bounds = array<i64: 1, 128>}, {pipeline_mode = #tpu.pipeline_mode<synchronous>, transform_indices = @transform_4, window_bounds = array<i64: 128, 128>}, {pipeline_mode = #tpu.pipeline_mode<synchronous>, transform_indices = @transform_5, window_bounds = array<i64: 1, 128>}, {pipeline_mode = #tpu.pipeline_mode<synchronous>, transform_indices = @transform_6, window_bounds = array<i64: 128, 64>}, {pipeline_mode = #tpu.pipeline_mode<synchronous>, transform_indices = @transform_7, window_bounds = array<i64: 1, 64>}, {transform_indices = @transform_8, window_bounds = array<i64: 2, 96>}]} {
    %c0 = arith.constant 0 : index
    %c0_0 = arith.constant 0 : index
    %0 = vector.load %arg1[%c0, %c0_0] : memref<2x64xbf16, #tpu.memory_space<vmem>>, vector<2x64xbf16>
    %c0_1 = arith.constant 0 : index
    %c0_2 = arith.constant 0 : index
    %1 = vector.load %arg3[%c0_1, %c0_2] : memref<64x128xbf16, #tpu.memory_space<vmem>>, vector<64x128xbf16>
    %cst = arith.constant dense<0.000000e+00> : vector<2x128xf32>
    %2 = tpu.matmul %0, %1, %cst {dimension_numbers = #tpu.dot_dimension_numbers<[1], [0], [0], [1], [0, 0, 1, 1], [], []>} : vector<2x64xbf16>, vector<64x128xbf16>, vector<2x128xf32> -> vector<2x128xf32>
    %c0_3 = arith.constant 0 : index
    %c0_4 = arith.constant 0 : index
    %3 = vector.load %arg4[%c0_3, %c0_4] : memref<1x128xf32, #tpu.memory_space<vmem>>, vector<1x128xf32>
    %4 = vector.broadcast %3 : vector<1x128xf32> to vector<2x128xf32>
    %5 = arith.addf %2, %4 : vector<2x128xf32>
    %cst_5 = arith.constant 0.000000e+00 : f32
    %6 = vector.broadcast %cst_5 : f32 to vector<2x128xf32>
    %7 = arith.maximumf %5, %6 : vector<2x128xf32>
    %8 = arith.truncf %7 : vector<2x128xf32> to vector<2x128xbf16>
    %c0_6 = arith.constant 0 : index
    %c0_7 = arith.constant 0 : index
    %9 = vector.load %arg5[%c0_6, %c0_7] : memref<128x128xbf16, #tpu.memory_space<vmem>>, vector<128x128xbf16>
    %cst_8 = arith.constant dense<0.000000e+00> : vector<2x128xf32>
    %10 = tpu.matmul %8, %9, %cst_8 {dimension_numbers = #tpu.dot_dimension_numbers<[1], [0], [0], [1], [0, 0, 1, 1], [], []>} : vector<2x128xbf16>, vector<128x128xbf16>, vector<2x128xf32> -> vector<2x128xf32>
    %c0_9 = arith.constant 0 : index
    %c0_10 = arith.constant 0 : index
    %11 = vector.load %arg6[%c0_9, %c0_10] : memref<1x128xf32, #tpu.memory_space<vmem>>, vector<1x128xf32>
    %12 = vector.broadcast %11 : vector<1x128xf32> to vector<2x128xf32>
    %13 = arith.addf %10, %12 : vector<2x128xf32>
    %cst_11 = arith.constant 0.000000e+00 : f32
    %14 = vector.broadcast %cst_11 : f32 to vector<2x128xf32>
    %15 = arith.maximumf %13, %14 : vector<2x128xf32>
    %16 = arith.truncf %15 : vector<2x128xf32> to vector<2x128xbf16>
    %c0_12 = arith.constant 0 : index
    %c0_13 = arith.constant 0 : index
    %17 = vector.load %arg7[%c0_12, %c0_13] : memref<128x64xbf16, #tpu.memory_space<vmem>>, vector<128x64xbf16>
    %cst_14 = arith.constant dense<0.000000e+00> : vector<2x64xf32>
    %18 = tpu.matmul %16, %17, %cst_14 {dimension_numbers = #tpu.dot_dimension_numbers<[1], [0], [0], [1], [0, 0, 1, 1], [], []>} : vector<2x128xbf16>, vector<128x64xbf16>, vector<2x64xf32> -> vector<2x64xf32>
    %c0_15 = arith.constant 0 : index
    %c0_16 = arith.constant 0 : index
    %19 = vector.load %arg8[%c0_15, %c0_16] : memref<1x64xf32, #tpu.memory_space<vmem>>, vector<1x64xf32>
    %20 = vector.broadcast %19 : vector<1x64xf32> to vector<2x64xf32>
    %21 = arith.addf %18, %20 : vector<2x64xf32>
    %22 = tpu.iota {dimensions = array<i32: 1>} : vector<2x64xi32>
    %c32_i32 = arith.constant 32 : i32
    %23 = vector.broadcast %c32_i32 : i32 to vector<2x64xi32>
    %24 = arith.cmpi slt, %22, %23 : vector<2x64xi32>
    %25 = math.exp %21 : vector<2x64xf32>
    %26 = arith.select %24, %21, %25 : vector<2x64xi1>, vector<2x64xf32>
    %27 = vector.extract_strided_slice %26 {offsets = [0, 0], sizes = [2, 32], strides = [1, 1]} : vector<2x64xf32> to vector<2x32xf32>
    %28 = vector.extract_strided_slice %26 {offsets = [0, 32], sizes = [2, 32], strides = [1, 1]} : vector<2x64xf32> to vector<2x32xf32>
    %c0_17 = arith.constant 0 : index
    %c0_18 = arith.constant 0 : index
    %29 = vector.load %arg2[%c0_17, %c0_18] : memref<2x32xf32, #tpu.memory_space<vmem>>, vector<2x32xf32>
    %30 = arith.mulf %28, %29 : vector<2x32xf32>
    %31 = arith.addf %27, %30 : vector<2x32xf32>
    %32 = tpu.concatenate %31, %26 in 1 : vector<2x32xf32>, vector<2x64xf32> -> vector<2x96xf32>
    %c0_19 = arith.constant 0 : index
    %c0_20 = arith.constant 0 : index
    %33 = vector.load %arg9[%c0_19, %c0_20] : memref<2x96xf32, #tpu.memory_space<vmem>>, vector<2x96xf32>
    tpu.vector_store %arg9[%c0_19, %c0_20], %32 {strides = array<i32>} : memref<2x96xf32, #tpu.memory_space<vmem>>, vector<2x96xf32>,
    return
  }
  func.func @transform_0(%arg0: i32) -> (i32, i32) {
    %c0_i32 = arith.constant 0 : i32
    %c0_i32_0 = arith.constant 0 : i32
    return %arg0, %c0_i32 : i32, i32
  }
  func.func @transform_1(%arg0: i32) -> (i32, i32) {
    %c0_i32 = arith.constant 0 : i32
    %c0_i32_0 = arith.constant 0 : i32
    return %arg0, %c0_i32 : i32, i32
  }
  func.func @transform_2(%arg0: i32) -> (i32, i32) {
    %c0_i32 = arith.constant 0 : i32
    %c0_i32_0 = arith.constant 0 : i32
    %c0_i32_1 = arith.constant 0 : i32
    return %c0_i32, %c0_i32_0 : i32, i32
  }
  func.func @transform_3(%arg0: i32) -> (i32, i32) {
    %c0_i32 = arith.constant 0 : i32
    %c0_i32_0 = arith.constant 0 : i32
    %c0_i32_1 = arith.constant 0 : i32
    return %c0_i32, %c0_i32_0 : i32, i32
  }
  func.func @transform_4(%arg0: i32) -> (i32, i32) {
    %c0_i32 = arith.constant 0 : i32
    %c0_i32_0 = arith.constant 0 : i32
    %c0_i32_1 = arith.constant 0 : i32
    return %c0_i32, %c0_i32_0 : i32, i32
  }
  func.func @transform_5(%arg0: i32) -> (i32, i32) {
    %c0_i32 = arith.constant 0 : i32
    %c0_i32_0 = arith.constant 0 : i32
    %c0_i32_1 = arith.constant 0 : i32
    return %c0_i32, %c0_i32_0 : i32, i32
  }
  func.func @transform_6(%arg0: i32) -> (i32, i32) {
    %c0_i32 = arith.constant 0 : i32
    %c0_i32_0 = arith.constant 0 : i32
    %c0_i32_1 = arith.constant 0 : i32
    return %c0_i32, %c0_i32_0 : i32, i32
  }
  func.func @transform_7(%arg0: i32) -> (i32, i32) {
    %c0_i32 = arith.constant 0 : i32
    %c0_i32_0 = arith.constant 0 : i32
    %c0_i32_1 = arith.constant 0 : i32
    return %c0_i32, %c0_i32_0 : i32, i32
  }
  func.func @transform_8(%arg0: i32) -> (i32, i32) {
    %c0_i32 = arith.constant 0 : i32
    %c0_i32_0 = arith.constant 0 : i32
    return %arg0, %c0_i32 : i32, i32
  }
}

</mosaic_0001>

<llo_original>
// kernel: tpu_custom_call.1
$region0: #{tpu_custom_call.1}
  #allocation0 [shape = 'u32[]', space=smem, size = 0x4, offset = 0x4, fixed_abs, tag = 'smem constant byte address 0x4 - core index']
  #allocation1 [shape = 'u32[144,128]{1,0:T(1,128)}', space=vmem, size = 0x12000, scoped, tag = 'internal scratch']
  %s0 = inlined_call_operand.vmem [shape: bf16[2,64], index: 0, kind: input, shape index: {}]
  %s1 = inlined_call_operand.vmem [shape: f32[2,32], index: 1, kind: input, shape index: {}]
  %s2 = inlined_call_operand.vmem [shape: bf16[64,128], index: 2, kind: input, shape index: {}]
  %s3 = inlined_call_operand.vmem [shape: f32[1,128], index: 3, kind: input, shape index: {}]
  %s4 = inlined_call_operand.vmem [shape: bf16[128,128], index: 4, kind: input, shape index: {}]
  %s5 = inlined_call_operand.vmem [shape: f32[1,128], index: 5, kind: input, shape index: {}]
  %s6 = inlined_call_operand.vmem [shape: bf16[128,64], index: 6, kind: input, shape index: {}]
  %s7 = inlined_call_operand.vmem [shape: f32[1,64], index: 7, kind: input, shape index: {}]
  %s8 = inlined_call_operand.hbm [shape: f32[2,96], index: 8, kind: output, shape index: {}]
  %s9 = sld [smem:[#allocation0]]
  $region42: #{tpu_custom_call.1} parent=0
    _
  %s11 = ssub.s32 1, %s9
  %s12 = scalar_select 0, %s11, %s9
  $region1: #{tpu_custom_call.1} parent=0
    #allocation2 [shape = 'u8[1024]{0}', space=vmem, size = 0x400, scoped, tag = 'output window, operand 0, single buffered']
    #allocation3 [shape = 's32[1]{0}', space=sflag, size = 0x4, scoped, tag = 'scoped memory for tpu_custom_call.1']
    %13 = vsyncpa [#allocation3], 0
    // Predicated region
    $region2: #{tpu_custom_call.1} parent=1 // pred_check
      _
    $region3: #{tpu_custom_call.1} parent=1 // pred_check_branch
      %15 = sbr.rel (0) target = $region5
    $region4: #{tpu_custom_call.1} parent=1 // pred_region
      _
    $region5: #{tpu_custom_call.1} parent=1 // pred_fallthru
      _
    // Predicated region
    $region6: #{tpu_custom_call.1} parent=1 // pred_check
      _
    $region7: #{tpu_custom_call.1} parent=1 // pred_check_branch
      %17 = sbr.rel (0) target = $region9
    $region8: #{tpu_custom_call.1} parent=1 // pred_region
      _
    $region9: #{tpu_custom_call.1} parent=1 // pred_fallthru
      _
    // Predicated region
    $region10: #{tpu_custom_call.1} parent=1 // pred_check
      _
    $region11: #{tpu_custom_call.1} parent=1 // pred_check_branch
      %19 = sbr.rel (0) target = $region13
    $region12: #{tpu_custom_call.1} parent=1 // pred_region
      _
    $region13: #{tpu_custom_call.1} parent=1 // pred_fallthru
      _
    // Predicated region
    $region14: #{tpu_custom_call.1} parent=1 // pred_check
      _
    $region15: #{tpu_custom_call.1} parent=1 // pred_check_branch
      %21 = sbr.rel (0) target = $region17
    $region16: #{tpu_custom_call.1} parent=1 // pred_region
      _
    $region17: #{tpu_custom_call.1} parent=1 // pred_fallthru
      _
    // Predicated region
    $region18: #{tpu_custom_call.1} parent=1 // pred_check
      _
    $region19: #{tpu_custom_call.1} parent=1 // pred_check_branch
      %23 = sbr.rel (0) target = $region21
    $region20: #{tpu_custom_call.1} parent=1 // pred_region
      _
    $region21: #{tpu_custom_call.1} parent=1 // pred_fallthru
      _
    // Predicated region
    $region22: #{tpu_custom_call.1} parent=1 // pred_check
      _
    $region23: #{tpu_custom_call.1} parent=1 // pred_check_branch
      %25 = sbr.rel (0) target = $region25
    $region24: #{tpu_custom_call.1} parent=1 // pred_region
      _
    $region25: #{tpu_custom_call.1} parent=1 // pred_fallthru
      _
    // Predicated region
    $region26: #{tpu_custom_call.1} parent=1 // pred_check
      _
    $region27: #{tpu_custom_call.1} parent=1 // pred_check_branch
      %27 = sbr.rel (0) target = $region29
    $region28: #{tpu_custom_call.1} parent=1 // pred_region
      _
    $region29: #{tpu_custom_call.1} parent=1 // pred_fallthru
      _
    // Predicated region
    $region30: #{tpu_custom_call.1} parent=1 // pred_check
      _
    $region31: #{tpu_custom_call.1} parent=1 // pred_check_branch
      %29 = sbr.rel (0) target = $region33
    $region32: #{tpu_custom_call.1} parent=1 // pred_region
      _
    $region33: #{tpu_custom_call.1} parent=1 // pred_fallthru
      _
    %v31 = vld [vmem:[%s0] sm:$0x1]
    %v32 = vld [vmem:[%s2] sm:$0xf]
    %v33 = vld [vmem:[%s2 + $0x4] sm:$0xf]
    %v34 = vld [vmem:[%s2 + $0x8] sm:$0xf]
    %v35 = vld [vmem:[%s2 + $0xc] sm:$0xf]
    %v36 = vld [vmem:[%s2 + $0x10] sm:$0xf]
    %v37 = vld [vmem:[%s2 + $0x14] sm:$0xf]
    %v38 = vld [vmem:[%s2 + $0x18] sm:$0xf]
    %v39 = vld [vmem:[%s2 + $0x1c] sm:$0xf]
    %v40 = vld [vmem:[%s3] sm:$0x1]
    %v42 = vlaneseq
    %v43 = vshrl.u32 %v42, 7
    %v44 = vsub.s32 0, %v43
    %v45 = vrot.slane %v40, %v44
    %v55 = vunpack.c.l.b16 %v32
    %v56 = vunpack.c.l.b16 %v33
    %v57 = vunpack.c.l.b16 %v34
    %v58 = vunpack.c.l.b16 %v35
    %v59 = vunpack.c.l.b16 %v36
    %v60 = vunpack.c.l.b16 %v37
    %v61 = vunpack.c.l.b16 %v38
    %v62 = vunpack.c.l.b16 %v39
    %v63 = vpack.c.b16 %v56, %v55
    %v64 = vpack.c.b16 %v58, %v57
    %v65 = vpack.c.b16 %v60, %v59
    %v66 = vpack.c.b16 %v62, %v61
    %vm71 = vcmask 523264
    %v73 = vsel %vm71, %v31, 0
    %75 = vmatprep.subr.bf16.mxu0 0
    %76 = vmatpush1.bf16.msra.mxu0 %v63
    %77 = vmatprep.subr.bf16.mxu0 0
    %78 = vmatpush1.bf16.msra.mxu0 %v64
    %79 = vmatprep.subr.bf16.mxu0 0
    %80 = vmatpush1.bf16.msra.mxu0 %v65
    %81 = vmatprep.subr.bf16.mxu0 0
    %82 = vmatpush1.bf16.msra.mxu0 %v66
    %83 = vmatprep.subr.bf16.mxu0 0
    %84 = vmatpush1.bf16.msra.mxu0 0
    %85 = vmatprep.subr.bf16.mxu0 0
    %86 = vmatpush1.bf16.msra.mxu0 0
    %87 = vmatprep.subr.bf16.mxu0 0
    %88 = vmatpush1.bf16.msra.mxu0 0
    %89 = vmatprep.subr.bf16.mxu0 0
    %90 = vmatpush1.bf16.msra.mxu0 0
    %91 = vmatprep.subr.bf16.mxu0 0
    %92 = vmatpush1.bf16.msra.mxu0 0
    %93 = vmatprep.subr.bf16.mxu0 0
    %94 = vmatpush1.bf16.msra.mxu0 0
    %95 = vmatprep.subr.bf16.mxu0 0
    %96 = vmatpush1.bf16.msra.mxu0 0
    %97 = vmatprep.subr.bf16.mxu0 0
    %98 = vmatpush1.bf16.msra.mxu0 0
    %99 = vmatprep.subr.bf16.mxu0 0
    %100 = vmatpush1.bf16.msra.mxu0 0
    %101 = vmatprep.subr.bf16.mxu0 0
    %102 = vmatpush1.bf16.msra.mxu0 0
    %103 = vmatprep.subr.bf16.mxu0 0
    %104 = vmatpush1.bf16.msra.mxu0 0
    %105 = vmatprep.subr.bf16.mxu0 0
    %106 = vmatpush1.bf16.msra.mxu0 0
    %107 = vmatprep.mubr.bf16.mxu0 0
    %108 = vmatmul.mubr.bf16.gmra.mrb[0].mxu0 %v73
    %v109 = vpop.f32.mrb[0].mxu0
    %v110 = vadd.f32 %v45, %v109
    %v111 = vpop.f32.mrb[0].mxu0
    %v112 = vpop.f32.mrb[0].mxu0
    %v113 = vpop.f32.mrb[0].mxu0
    %114 = vdwg.mxu0
    %v115 = vmax.f32 %v110, 0.0
    %v116 = vpack.c.bf16 %v115, %v115
    %v117 = vld [vmem:[%s4] sm:$0xf]
    %v118 = vld [vmem:[%s4 + $0x4] sm:$0xf]
    %v119 = vld [vmem:[%s4 + $0x8] sm:$0xf]
    %v120 = vld [vmem:[%s4 + $0xc] sm:$0xf]
    %v121 = vld [vmem:[%s4 + $0x10] sm:$0xf]
    %v122 = vld [vmem:[%s4 + $0x14] sm:$0xf]
    %v123 = vld [vmem:[%s4 + $0x18] sm:$0xf]
    %v124 = vld [vmem:[%s4 + $0x1c] sm:$0xf]
    %v125 = vld [vmem:[%s4 + $0x20] sm:$0xf]
    %v126 = vld [vmem:[%s4 + $0x24] sm:$0xf]
    %v127 = vld [vmem:[%s4 + $0x28] sm:$0xf]
    %v128 = vld [vmem:[%s4 + $0x2c] sm:$0xf]
    %v129 = vld [vmem:[%s4 + $0x30] sm:$0xf]
    %v130 = vld [vmem:[%s4 + $0x34] sm:$0xf]
    %v131 = vld [vmem:[%s4 + $0x38] sm:$0xf]
    %v132 = vld [vmem:[%s4 + $0x3c] sm:$0xf]
    %v133 = vld [vmem:[%s5] sm:$0x1]
    %v135 = vlaneseq
    %v136 = vshrl.u32 %v135, 7
    %v137 = vsub.s32 0, %v136
    %v138 = vrot.slane %v133, %v137
    %v156 = vunpack.c.l.b16 %v117
    %v157 = vunpack.c.l.b16 %v118
    %v158 = vunpack.c.l.b16 %v119
    %v159 = vunpack.c.l.b16 %v120
    %v160 = vunpack.c.l.b16 %v121
    %v161 = vunpack.c.l.b16 %v122
    %v162 = vunpack.c.l.b16 %v123
    %v163 = vunpack.c.l.b16 %v124
    %v164 = vunpack.c.l.b16 %v125
    %v165 = vunpack.c.l.b16 %v126
    %v166 = vunpack.c.l.b16 %v127
    %v167 = vunpack.c.l.b16 %v128
    %v168 = vunpack.c.l.b16 %v129
    %v169 = vunpack.c.l.b16 %v130
    %v170 = vunpack.c.l.b16 %v131
    %v171 = vunpack.c.l.b16 %v132
    %v172 = vpack.c.b16 %v157, %v156
    %v173 = vpack.c.b16 %v159, %v158
    %v174 = vpack.c.b16 %v161, %v160
    %v175 = vpack.c.b16 %v163, %v162
    %v176 = vpack.c.b16 %v165, %v164
    %v177 = vpack.c.b16 %v167, %v166
    %v178 = vpack.c.b16 %v169, %v168
    %v179 = vpack.c.b16 %v171, %v170
    %188 = vmatprep.subr.bf16.mxu0 0
    %189 = vmatpush1.bf16.msra.mxu0 %v172
    %190 = vmatprep.subr.bf16.mxu0 0
    %191 = vmatpush1.bf16.msra.mxu0 %v173
    %192 = vmatprep.subr.bf16.mxu0 0
    %193 = vmatpush1.bf16.msra.mxu0 %v174
    %194 = vmatprep.subr.bf16.mxu0 0
    %195 = vmatpush1.bf16.msra.mxu0 %v175
    %196 = vmatprep.subr.bf16.mxu0 0
    %197 = vmatpush1.bf16.msra.mxu0 %v176
    %198 = vmatprep.subr.bf16.mxu0 0
    %199 = vmatpush1.bf16.msra.mxu0 %v177
    %200 = vmatprep.subr.bf16.mxu0 0
    %201 = vmatpush1.bf16.msra.mxu0 %v178
    %202 = vmatprep.subr.bf16.mxu0 0
    %203 = vmatpush1.bf16.msra.mxu0 %v179
    %204 = vmatprep.subr.bf16.mxu0 0
    %205 = vmatpush1.bf16.msra.mxu0 0
    %206 = vmatprep.subr.bf16.mxu0 0
    %207 = vmatpush1.bf16.msra.mxu0 0
    %208 = vmatprep.subr.bf16.mxu0 0
    %209 = vmatpush1.bf16.msra.mxu0 0
    %210 = vmatprep.subr.bf16.mxu0 0
    %211 = vmatpush1.bf16.msra.mxu0 0
    %212 = vmatprep.subr.bf16.mxu0 0
    %213 = vmatpush1.bf16.msra.mxu0 0
    %214 = vmatprep.subr.bf16.mxu0 0
    %215 = vmatpush1.bf16.msra.mxu0 0
    %216 = vmatprep.subr.bf16.mxu0 0
    %217 = vmatpush1.bf16.msra.mxu0 0
    %218 = vmatprep.subr.bf16.mxu0 0
    %219 = vmatpush1.bf16.msra.mxu0 0
    %220 = vmatprep.mubr.bf16.mxu0 0
    %221 = vmatmul.mubr.bf16.gmra.mrb[0].mxu0 %v116
    %v222 = vpop.f32.mrb[0].mxu0
    %v223 = vadd.f32 %v138, %v222
    %v224 = vpop.f32.mrb[0].mxu0
    %v225 = vpop.f32.mrb[0].mxu0
    %v226 = vpop.f32.mrb[0].mxu0
    %227 = vdwg.mxu0
    %v228 = vmax.f32 %v223, 0.0
    %v229 = vpack.c.bf16 %v228, %v228
    %v230 = vld [vmem:[%s6] sm:$0xf]
    %v231 = vld [vmem:[%s6 + $0x4] sm:$0xf]
    %v232 = vld [vmem:[%s6 + $0x8] sm:$0xf]
    %v233 = vld [vmem:[%s6 + $0xc] sm:$0xf]
    %v234 = vld [vmem:[%s6 + $0x10] sm:$0xf]
    %v235 = vld [vmem:[%s6 + $0x14] sm:$0xf]
    %v236 = vld [vmem:[%s6 + $0x18] sm:$0xf]
    %v237 = vld [vmem:[%s6 + $0x1c] sm:$0xf]
    %v238 = vld [vmem:[%s6 + $0x20] sm:$0xf]
    %v239 = vld [vmem:[%s6 + $0x24] sm:$0xf]
    %v240 = vld [vmem:[%s6 + $0x28] sm:$0xf]
    %v241 = vld [vmem:[%s6 + $0x2c] sm:$0xf]
    %v242 = vld [vmem:[%s6 + $0x30] sm:$0xf]
    %v243 = vld [vmem:[%s6 + $0x34] sm:$0xf]
    %v244 = vld [vmem:[%s6 + $0x38] sm:$0xf]
    %v245 = vld [vmem:[%s6 + $0x3c] sm:$0xf]
    %v246 = vld [vmem:[%s7] sm:$0x1]
    %v248 = vlaneseq
    %v249 = vshrl.u32 %v248, 7
    %v250 = vsub.s32 0, %v249
    %v251 = vrot.slane %v246, %v250
    %v269 = vunpack.c.l.b16 %v230
    %v270 = vunpack.c.l.b16 %v231
    %v271 = vunpack.c.l.b16 %v232
    %v272 = vunpack.c.l.b16 %v233
    %v273 = vunpack.c.l.b16 %v234
    %v274 = vunpack.c.l.b16 %v235
    %v275 = vunpack.c.l.b16 %v236
    %v276 = vunpack.c.l.b16 %v237
    %v277 = vunpack.c.l.b16 %v238
    %v278 = vunpack.c.l.b16 %v239
    %v279 = vunpack.c.l.b16 %v240
    %v280 = vunpack.c.l.b16 %v241
    %v281 = vunpack.c.l.b16 %v242
    %v282 = vunpack.c.l.b16 %v243
    %v283 = vunpack.c.l.b16 %v244
    %v284 = vunpack.c.l.b16 %v245
    %v285 = vpack.c.b16 %v270, %v269
    %v286 = vpack.c.b16 %v272, %v271
    %v287 = vpack.c.b16 %v274, %v273
    %v288 = vpack.c.b16 %v276, %v275
    %v289 = vpack.c.b16 %v278, %v277
    %v290 = vpack.c.b16 %v280, %v279
    %v291 = vpack.c.b16 %v282, %v281
    %v292 = vpack.c.b16 %v284, %v283
    %301 = vmatprep.subr.bf16.mxu0 0
    %302 = vmatpush1.bf16.msra.mxu0 %v285
    %303 = vmatprep.subr.bf16.mxu0 0
    %304 = vmatpush1.bf16.msra.mxu0 %v286
    %305 = vmatprep.subr.bf16.mxu0 0
    %306 = vmatpush1.bf16.msra.mxu0 %v287
    %307 = vmatprep.subr.bf16.mxu0 0
    %308 = vmatpush1.bf16.msra.mxu0 %v288
    %309 = vmatprep.subr.bf16.mxu0 0
    %310 = vmatpush1.bf16.msra.mxu0 %v289
    %311 = vmatprep.subr.bf16.mxu0 0
    %312 = vmatpush1.bf16.msra.mxu0 %v290
    %313 = vmatprep.subr.bf16.mxu0 0
    %314 = vmatpush1.bf16.msra.mxu0 %v291
    %315 = vmatprep.subr.bf16.mxu0 0
    %316 = vmatpush1.bf16.msra.mxu0 %v292
    %317 = vmatprep.subr.bf16.mxu0 0
    %318 = vmatpush1.bf16.msra.mxu0 0
    %319 = vmatprep.subr.bf16.mxu0 0
    %320 = vmatpush1.bf16.msra.mxu0 0
    %321 = vmatprep.subr.bf16.mxu0 0
    %322 = vmatpush1.bf16.msra.mxu0 0
    %323 = vmatprep.subr.bf16.mxu0 0
    %324 = vmatpush1.bf16.msra.mxu0 0
    %325 = vmatprep.subr.bf16.mxu0 0
    %326 = vmatpush1.bf16.msra.mxu0 0
    %327 = vmatprep.subr.bf16.mxu0 0
    %328 = vmatpush1.bf16.msra.mxu0 0
    %329 = vmatprep.subr.bf16.mxu0 0
    %330 = vmatpush1.bf16.msra.mxu0 0
    %331 = vmatprep.subr.bf16.mxu0 0
    %332 = vmatpush1.bf16.msra.mxu0 0
    %333 = vmatprep.mubr.bf16.mxu0 0
    %334 = vmatmul.mubr.bf16.gmra.mrb[0].mxu0 %v229
    %v335 = vpop.f32.mrb[0].mxu0
    %v336 = vadd.f32 %v251, %v335
    %v337 = vpop.f32.mrb[0].mxu0
    %v338 = vpop.f32.mrb[0].mxu0
    %v339 = vpop.f32.mrb[0].mxu0
    %340 = vdwg.mxu0
    %v341 = vlaneseq
    %v342 = vand.u32 %v341, 127
    %vm343 = vcmp.lt.s32.totalorder %v342, 32
    %v344 = vmul.f32 %v336, 1.442695
    %v345 = vpow.pop %v344
    %v346 = vsel %vm343, %v336, %v345
    %v347 = vld [vmem:[%s1] sm:$0x3]
    %349 = vrot.lane.b32.xlu0 %v347, 32
    %v350 = vpop.permute.xlu0 %349
    %v352 = vmul.f32 %v346, %v350
    %354 = vrot.lane.b32.xlu0 %v352, 96
    %v355 = vpop.permute.xlu0 %354
    %v357 = vadd.f32 %v346, %v355
    %359 = vrot.lane.b32.xlu0 %v346, 32
    %v360 = vpop.permute.xlu0 %359
    %vm362 = vcmask 261120
    %v363 = vsel %vm362, %v357, %v360
    %vm364 = vcmask 779264
    %365 = vst.msk [vmem:[#allocation2] sm:$0x3] %vm364, %v363
    // Predicated region
    $region34: #{tpu_custom_call.1} parent=1 // pred_check
      _
    $region35: #{tpu_custom_call.1} parent=1 // pred_check_branch
      %367 = sbr.rel (0) target = $region37
    $region36: #{tpu_custom_call.1} parent=1 // pred_region
      %s369 = ssub.s32 32, 32
      %370 = vsyncadd [#allocation3], %s369
      %s372 = sshll.u32 [#allocation2], 4
      %s373 = int_to_ptr.vmem [resolvable:$true] %s372
      %375 = dma.vmem_to_hbm [thread:$0]  %s373, 32, %s8, [#allocation3]
    $region37: #{tpu_custom_call.1} parent=1 // pred_fallthru
      _
    // Predicated region
    $region38: #{tpu_custom_call.1} parent=1 // pred_check
      _
    $region39: #{tpu_custom_call.1} parent=1 // pred_check_branch
      %377 = sbr.rel (0) target = $region41
    $region40: #{tpu_custom_call.1} parent=1 // pred_region
      %378 = dma.done [#allocation3], 32
    $region41: #{tpu_custom_call.1} parent=1 // pred_fallthru
      _
    %379 = vsyncpa [#allocation3], 1

</llo_original>
